<compile_context>
chip_gen: v7x
topology: tpu7x:2x2x1
jax: 0.10.0
libtpu: 0.0.40
codegen_flags: <defaults>
</compile_context>

<pallas_src>
import functools
import math

import jax
import jax.numpy as jnp
from jax import lax
from jax.experimental import pallas as pl
from jax.experimental.pallas import tpu as pltpu

LANE = 128


def _round_up(x, m):
    return (x + m - 1) // m * m


def _vmem_fixed_bytes(m, kdim, cp, mq):
    # resident f32 y scratch + resident pooled out block + double-buffered bf16 weights + stats
    return m * cp * 4 + mq * cp * 4 + 2 * kdim * cp * 2 + 8 * cp * 4


def _pick_tm(m, kdim, cp, mq, budget=10 << 20):
    """VMEM-budget-aware M-block size (avoids silent VMEM OOM as K grows with depth)."""
    fixed = _vmem_fixed_bytes(m, kdim, cp, mq)
    for tm in (1024, 512, 256, 128):
        if m % tm == 0 and fixed + 2 * tm * kdim * 2 <= budget:
            return tm
    # TODO(synk): remainder/masking path when M is not a multiple of 128, and a 2-kernel
    #             fallback (stats pass + bn/relu/pool pass) when the resident y scratch itself
    #             exceeds the per-generation VMEM budget at large N*H*W.
    return m


# ------ fused kernel: conv-as-matmul + BN batch stats + BN affine + ReLU + MaxPool2d(2) ------

def _fused_kernel(p_ref, w_ref, g_ref, b_ref, o_ref, y_scr, sum_scr, sq_scr, *,
                  tm, mq, inv_m, eps):
    i = pl.program_id(0)

    @pl.when(i == 0)
    def _():
        sum_scr[...] = jnp.zeros_like(sum_scr)
        sq_scr[...] = jnp.zeros_like(sq_scr)

    # bf16 x bf16 -> f32 MXU matmul (f32 accumulation).
    y_blk = jnp.dot(p_ref[...], w_ref[...], preferred_element_type=jnp.float32)

    # Stage the conv output in the VMEM-resident scratch (never written to HBM: full fusion).
    row0 = pl.multiple_of(i * tm, tm)
    y_scr[pl.ds(row0, tm), :] = y_blk

    # Fused per-channel batch statistics from the f32 accumulator.
    sum_scr[...] += jnp.sum(y_blk, axis=0, keepdims=True)
    sq_scr[...] += jnp.sum(y_blk * y_blk, axis=0, keepdims=True)

    @pl.when(i == pl.num_programs(0) - 1)
    def _():
        mean = sum_scr[...] * inv_m
        # TODO(synk): E[x^2]-E[x]^2 can cancel when |mean| >> std; a centered second pass over
        #             y_scr (already VMEM-resident here) would be more robust for deep nets.
        var = jnp.maximum(sq_scr[...] * inv_m - mean * mean, 0.0)
        scale = g_ref[...] * lax.rsqrt(var + eps)   # rsqrt -> EUP slot
        shift = b_ref[...] - mean * scale

        # Rows are ordered (pool_pos, n, ho, wo): MaxPool2d(2) is an elementwise max over the
        # four contiguous Mq-row slices -> no reshapes, dense (8,128) tiles throughout.
        def z(p):
            return y_scr[p * mq:(p + 1) * mq, :] * scale + shift

        pooled = jnp.maximum(jnp.maximum(z(0), z(1)), jnp.maximum(z(2), z(3)))
        o_ref[...] = jnp.maximum(pooled, 0.0)        # ReLU commutes with max


def fused_conv_bn_relu_pool(patches, wmat, g_row, b_row, *, mq, m_count, eps):
    m, kdim = patches.shape
    cp = wmat.shape[1]
    tm = _pick_tm(m, kdim, cp, mq)
    est = _vmem_fixed_bytes(m, kdim, cp, mq) + 2 * tm * kdim * 2
    kernel = functools.partial(_fused_kernel, tm=tm, mq=mq, inv_m=1.0 / m_count, eps=eps)
    return pl.pallas_call(
        kernel,
        out_shape=jax.ShapeDtypeStruct((mq, cp), jnp.float32),
        grid_spec=pltpu.PrefetchScalarGridSpec(
            num_scalar_prefetch=0,
            grid=(m // tm,),
            in_specs=[
                pl.BlockSpec((tm, kdim), lambda i: (i, 0)),     # patches block (bf16)
                pl.BlockSpec((kdim, cp), lambda i: (0, 0)),     # weights (bf16, lane-padded)
                pl.BlockSpec((1, cp), lambda i: (0, 0)),        # gamma
                pl.BlockSpec((1, cp), lambda i: (0, 0)),        # beta
            ],
            out_specs=pl.BlockSpec((mq, cp), lambda i: (0, 0)),  # pooled output, written last
            scratch_shapes=[
                pltpu.VMEM((m, cp), jnp.float32),   # conv output, resident across M blocks
                pltpu.VMEM((1, cp), jnp.float32),   # per-channel sum
                pltpu.VMEM((1, cp), jnp.float32),   # per-channel sum of squares
            ],
        ),
        # Stats / y scratch accumulate across the M axis -> serial axis.
        compiler_params=pltpu.CompilerParams(
            dimension_semantics=("arbitrary",),
            vmem_limit_bytes=int(min(max(2 * est, 32 << 20), 64 << 20)),
        ),
    )(patches, wmat, g_row, b_row)


# ---------------- JAX glue: bf16 im2col in pool-position-major row order ----------------

def build_patches_pool_major(x_nhwc, cin, k, pad):
    """im2col -> (N*H*W, k*k*cin) bf16; rows ordered (pool_pos, n, ho, wo), cols (dy, dx, cin).

    Built directly in the target order with a single concat (no separate 6-D transpose pass)
    and in bf16, halving the k^2-inflated glue bytes.
    """
    n, h, w, _ = x_nhwc.shape
    x = x_nhwc[..., :cin].astype(jnp.bfloat16)       # drop previous layer's lane padding here
    xp = jnp.pad(x, ((0, 0), (pad, pad), (pad, pad), (0, 0)))
    ho, wo = h // 2, w // 2
    pieces = []
    for py in range(2):
        for px in range(2):
            taps = [xp[:, py + dy: py + dy + h: 2, px + dx: px + dx + w: 2, :]
                    for dy in range(k) for dx in range(k)]
            pieces.append(jnp.concatenate(taps, axis=-1).reshape(n * ho * wo, k * k * cin))
    return jnp.concatenate(pieces, axis=0)           # (N*H*W, k*k*cin)


def cnn_block(x_nhwc, cin, w_oihw, gamma, beta, k, pad, eps=1e-5):
    n, h, w, _ = x_nhwc.shape
    cout = w_oihw.shape[0]
    assert h % 2 == 0 and w % 2 == 0, "toy shapes keep even spatial dims at every layer"
    ho, wo = h // 2, w // 2
    m, mq = n * h * w, n * ho * wo
    cp = _round_up(cout, LANE)                       # lane-dense padded channel count

    patches = build_patches_pool_major(x_nhwc, cin, k, pad)                 # (M, K) bf16
    # OIHW -> (kh, kw, Cin, Cout) -> (K, Cout) matching (dy, dx, cin) tap order; pad lanes.
    wmat = jnp.transpose(w_oihw, (2, 3, 1, 0)).reshape(k * k * cin, cout)
    wmat = jnp.pad(wmat, ((0, 0), (0, cp - cout))).astype(jnp.bfloat16)
    g_row = jnp.pad(gamma, (0, cp - cout)).reshape(1, cp)
    b_row = jnp.pad(beta, (0, cp - cout)).reshape(1, cp)

    out = fused_conv_bn_relu_pool(patches, wmat, g_row, b_row, mq=mq, m_count=m, eps=eps)
    # Keep the 128-lane padding flowing; the next layer's patch build slices channels as part
    # of its bf16 cast, and only the final forward output is de-padded.
    return out.reshape(n, ho, wo, cp), cout


def init_params(key, in_dim, hidden_dim, depth):
    """Deterministic init mirroring nn.Conv2d default (uniform +/- 1/sqrt(fan_in)),
    BatchNorm2d default gamma=1 beta=0."""
    assert depth > 0
    params = []
    cin, cout, k = in_dim, hidden_dim, 5
    for _ in range(depth):
        key, kw, kb = jax.random.split(key, 3)
        bound = 1.0 / math.sqrt(cin * k * k)
        w = jax.random.uniform(kw, (cout, cin, k, k), jnp.float32, -bound, bound)
        # Conv bias kept for parameter parity with nn.Conv2d but NOT used in compute: a bias
        # before training-mode BatchNorm is exactly cancelled by the batch-mean subtraction.
        b = jax.random.uniform(kb, (cout,), jnp.float32, -bound, bound)
        gamma = jnp.ones((cout,), jnp.float32)
        beta = jnp.zeros((cout,), jnp.float32)
        params.append((w, b, gamma, beta, k, k // 2))
        cin, cout, k = cout, cout * 2, 3
    return params


def simple_cnn_forward(x_nchw, params):
    # PyTorch NCHW -> NHWC for the kernels, back to NCHW at the end.
    x = jnp.transpose(x_nchw, (0, 2, 3, 1))
    cin = x.shape[-1]
    for (w, _b, gamma, beta, k, pad) in params:
        x, cin = cnn_block(x, cin, w, gamma, beta, k, pad)
    return jnp.transpose(x[..., :cin], (0, 3, 1, 2))


if __name__ == "__main__":
    in_dim, hidden_dim, depth = 4, 32, 2
    N, H, W = 2, 16, 16

    key = jax.random.PRNGKey(0)
    key, kx = jax.random.split(key)
    x = jax.random.normal(kx, (N, in_dim, H, W), jnp.float32)

    params = init_params(key, in_dim, hidden_dim, depth)

    out = simple_cnn_forward(x, params)
    out = jax.block_until_ready(out)

    # depth=2: spatial 16 -> 8 -> 4, channels 32 -> 64
    assert out.shape == (N, hidden_dim * 2 ** (depth - 1), H // 4, W // 4), out.shape
    assert out.dtype == jnp.float32
    assert bool(jnp.all(jnp.isfinite(out)))
    print("KERNEL_OK")
</pallas_src>

<mosaic_0001>
module attributes {stable_mosaic.version = 11 : i64} {
  func.func @_fused_kernel(%arg0: i32, %arg1: memref<512x100xbf16, #tpu.memory_space<vmem>>, %arg2: memref<100x128xbf16, #tpu.memory_space<vmem>>, %arg3: memref<1x128xf32, #tpu.memory_space<vmem>>, %arg4: memref<1x128xf32, #tpu.memory_space<vmem>>, %arg5: memref<128x128xf32, #tpu.memory_space<vmem>>, %arg6: memref<512x128xf32, #tpu.memory_space<vmem>>, %arg7: memref<1x128xf32, #tpu.memory_space<vmem>>, %arg8: memref<1x128xf32, #tpu.memory_space<vmem>>) attributes {dimension_semantics = [#tpu.dimension_semantics<arbitrary>], iteration_bounds = array<i64: 1>, scalar_prefetch = 0 : i64, scratch_operands = 3 : i64, tpu.core_type = #tpu.core_type<tc>, window_params = [{transform_indices = @transform_0, window_bounds = array<i64: 512, 100>}, {pipeline_mode = #tpu.pipeline_mode<synchronous>, transform_indices = @transform_1, window_bounds = array<i64: 100, 128>}, {pipeline_mode = #tpu.pipeline_mode<synchronous>, transform_indices = @transform_2, window_bounds = array<i64: 1, 128>}, {pipeline_mode = #tpu.pipeline_mode<synchronous>, transform_indices = @transform_3, window_bounds = array<i64: 1, 128>}, {pipeline_mode = #tpu.pipeline_mode<synchronous>, transform_indices = @transform_4, window_bounds = array<i64: 128, 128>}]} {
    %c0_i32 = arith.constant 0 : i32
    %0 = arith.cmpi eq, %arg0, %c0_i32 : i32
    %1 = arith.extui %0 : i1 to i32
    %c0_i32_0 = arith.constant 0 : i32
    %2 = arith.cmpi ne, %1, %c0_i32_0 : i32
    scf.if %2 {
      %cst_17 = arith.constant 0.000000e+00 : f32
      %24 = vector.broadcast %cst_17 : f32 to vector<1x128xf32>
      %c0_18 = arith.constant 0 : index
      %c0_19 = arith.constant 0 : index
      %25 = vector.load %arg7[%c0_18, %c0_19] : memref<1x128xf32, #tpu.memory_space<vmem>>, vector<1x128xf32>
      tpu.vector_store %arg7[%c0_18, %c0_19], %24 {strides = array<i32>} : memref<1x128xf32, #tpu.memory_space<vmem>>, vector<1x128xf32>,
      %cst_20 = arith.constant 0.000000e+00 : f32
      %26 = vector.broadcast %cst_20 : f32 to vector<1x128xf32>
      %c0_21 = arith.constant 0 : index
      %c0_22 = arith.constant 0 : index
      %27 = vector.load %arg8[%c0_21, %c0_22] : memref<1x128xf32, #tpu.memory_space<vmem>>, vector<1x128xf32>
      tpu.vector_store %arg8[%c0_21, %c0_22], %26 {strides = array<i32>} : memref<1x128xf32, #tpu.memory_space<vmem>>, vector<1x128xf32>,
    } else {
    }
    %c0 = arith.constant 0 : index
    %c0_1 = arith.constant 0 : index
    %3 = vector.load %arg1[%c0, %c0_1] : memref<512x100xbf16, #tpu.memory_space<vmem>>, vector<512x100xbf16>
    %c0_2 = arith.constant 0 : index
    %c0_3 = arith.constant 0 : index
    %4 = vector.load %arg2[%c0_2, %c0_3] : memref<100x128xbf16, #tpu.memory_space<vmem>>, vector<100x128xbf16>
    %cst = arith.constant dense<0.000000e+00> : vector<512x128xf32>
    %5 = tpu.matmul %3, %4, %cst {dimension_numbers = #tpu.dot_dimension_numbers<[1], [0], [0], [1], [0, 0, 1, 1], [], []>} : vector<512x100xbf16>, vector<100x128xbf16>, vector<512x128xf32> -> vector<512x128xf32>
    %c512_i32 = arith.constant 512 : i32
    %6 = arith.muli %arg0, %c512_i32 : i32
    %7 = tpu.assume_multiple %6, 512 : i32
    %8 = arith.index_cast %7 : i32 to index
    %c0_4 = arith.constant 0 : index
    %9 = vector.load %arg6[%8, %c0_4] : memref<512x128xf32, #tpu.memory_space<vmem>>, vector<512x128xf32>
    tpu.vector_store %arg6[%8, %c0_4], %5 {strides = array<i32>} : memref<512x128xf32, #tpu.memory_space<vmem>>, vector<512x128xf32>,
    %c0_5 = arith.constant 0 : index
    %c0_6 = arith.constant 0 : index
    %10 = vector.load %arg7[%c0_5, %c0_6] : memref<1x128xf32, #tpu.memory_space<vmem>>, vector<1x128xf32>
    %cst_7 = arith.constant dense<0.000000e+00> : vector<128xf32>
    %11 = vector.multi_reduction <add>, %5, %cst_7 [0] : vector<512x128xf32> to vector<128xf32>
    %12 = vector.shape_cast %11 : vector<128xf32> to vector<1x128xf32>
    %13 = arith.addf %10, %12 : vector<1x128xf32>
    %c0_8 = arith.constant 0 : index
    %c0_9 = arith.constant 0 : index
    %14 = vector.load %arg7[%c0_8, %c0_9] : memref<1x128xf32, #tpu.memory_space<vmem>>, vector<1x128xf32>
    tpu.vector_store %arg7[%c0_8, %c0_9], %13 {strides = array<i32>} : memref<1x128xf32, #tpu.memory_space<vmem>>, vector<1x128xf32>,
    %c0_10 = arith.constant 0 : index
    %c0_11 = arith.constant 0 : index
    %15 = vector.load %arg8[%c0_10, %c0_11] : memref<1x128xf32, #tpu.memory_space<vmem>>, vector<1x128xf32>
    %16 = arith.mulf %5, %5 : vector<512x128xf32>
    %cst_12 = arith.constant dense<0.000000e+00> : vector<128xf32>
    %17 = vector.multi_reduction <add>, %16, %cst_12 [0] : vector<512x128xf32> to vector<128xf32>
    %18 = vector.shape_cast %17 : vector<128xf32> to vector<1x128xf32>
    %19 = arith.addf %15, %18 : vector<1x128xf32>
    %c0_13 = arith.constant 0 : index
    %c0_14 = arith.constant 0 : index
    %20 = vector.load %arg8[%c0_13, %c0_14] : memref<1x128xf32, #tpu.memory_space<vmem>>, vector<1x128xf32>
    tpu.vector_store %arg8[%c0_13, %c0_14], %19 {strides = array<i32>} : memref<1x128xf32, #tpu.memory_space<vmem>>, vector<1x128xf32>,
    %c0_i32_15 = arith.constant 0 : i32
    %21 = arith.cmpi eq, %arg0, %c0_i32_15 : i32
    %22 = arith.extui %21 : i1 to i32
    %c0_i32_16 = arith.constant 0 : i32
    %23 = arith.cmpi ne, %22, %c0_i32_16 : i32
    scf.if %23 {
      %c0_17 = arith.constant 0 : index
      %c0_18 = arith.constant 0 : index
      %24 = vector.load %arg7[%c0_17, %c0_18] : memref<1x128xf32, #tpu.memory_space<vmem>>, vector<1x128xf32>
      %cst_19 = arith.constant 0.001953125 : f32
      %25 = vector.broadcast %cst_19 : f32 to vector<1x128xf32>
      %26 = arith.mulf %24, %25 : vector<1x128xf32>
      %c0_20 = arith.constant 0 : index
      %c0_21 = arith.constant 0 : index
      %27 = vector.load %arg8[%c0_20, %c0_21] : memref<1x128xf32, #tpu.memory_space<vmem>>, vector<1x128xf32>
      %cst_22 = arith.constant 0.001953125 : f32
      %28 = vector.broadcast %cst_22 : f32 to vector<1x128xf32>
      %29 = arith.mulf %27, %28 : vector<1x128xf32>
      %30 = arith.mulf %26, %26 : vector<1x128xf32>
      %31 = arith.subf %29, %30 : vector<1x128xf32>
      %cst_23 = arith.constant 0.000000e+00 : f32
      %32 = vector.broadcast %cst_23 : f32 to vector<1x128xf32>
      %33 = arith.maximumf %31, %32 : vector<1x128xf32>
      %c0_24 = arith.constant 0 : index
      %c0_25 = arith.constant 0 : index
      %34 = vector.load %arg3[%c0_24, %c0_25] : memref<1x128xf32, #tpu.memory_space<vmem>>, vector<1x128xf32>
      %cst_26 = arith.constant 9.99999974E-6 : f32
      %35 = vector.broadcast %cst_26 : f32 to vector<1x128xf32>
      %36 = arith.addf %33, %35 : vector<1x128xf32>
      %37 = math.rsqrt %36 : vector<1x128xf32>
      %38 = arith.mulf %34, %37 : vector<1x128xf32>
      %c0_27 = arith.constant 0 : index
      %c0_28 = arith.constant 0 : index
      %39 = vector.load %arg4[%c0_27, %c0_28] : memref<1x128xf32, #tpu.memory_space<vmem>>, vector<1x128xf32>
      %40 = arith.mulf %26, %38 : vector<1x128xf32>
      %41 = arith.subf %39, %40 : vector<1x128xf32>
      %c0_29 = arith.constant 0 : index
      %c0_30 = arith.constant 0 : index
      %42 = vector.load %arg6[%c0_29, %c0_30] : memref<512x128xf32, #tpu.memory_space<vmem>>, vector<128x128xf32>
      %43 = vector.broadcast %38 : vector<1x128xf32> to vector<128x128xf32>
      %44 = arith.mulf %42, %43 : vector<128x128xf32>
      %45 = vector.broadcast %41 : vector<1x128xf32> to vector<128x128xf32>
      %46 = arith.addf %44, %45 : vector<128x128xf32>
      %c128 = arith.constant 128 : index
      %c0_31 = arith.constant 0 : index
      %47 = vector.load %arg6[%c128, %c0_31] : memref<512x128xf32, #tpu.memory_space<vmem>>, vector<128x128xf32>
      %48 = vector.broadcast %38 : vector<1x128xf32> to vector<128x128xf32>
      %49 = arith.mulf %47, %48 : vector<128x128xf32>
      %50 = vector.broadcast %41 : vector<1x128xf32> to vector<128x128xf32>
      %51 = arith.addf %49, %50 : vector<128x128xf32>
      %52 = arith.maximumf %46, %51 : vector<128x128xf32>
      %c256 = arith.constant 256 : index
      %c0_32 = arith.constant 0 : index
      %53 = vector.load %arg6[%c256, %c0_32] : memref<512x128xf32, #tpu.memory_space<vmem>>, vector<128x128xf32>
      %54 = vector.broadcast %38 : vector<1x128xf32> to vector<128x128xf32>
      %55 = arith.mulf %53, %54 : vector<128x128xf32>
      %56 = vector.broadcast %41 : vector<1x128xf32> to vector<128x128xf32>
      %57 = arith.addf %55, %56 : vector<128x128xf32>
      %c384 = arith.constant 384 : index
      %c0_33 = arith.constant 0 : index
      %58 = vector.load %arg6[%c384, %c0_33] : memref<512x128xf32, #tpu.memory_space<vmem>>, vector<128x128xf32>
      %59 = vector.broadcast %38 : vector<1x128xf32> to vector<128x128xf32>
      %60 = arith.mulf %58, %59 : vector<128x128xf32>
      %61 = vector.broadcast %41 : vector<1x128xf32> to vector<128x128xf32>
      %62 = arith.addf %60, %61 : vector<128x128xf32>
      %63 = arith.maximumf %57, %62 : vector<128x128xf32>
      %64 = arith.maximumf %52, %63 : vector<128x128xf32>
      %cst_34 = arith.constant 0.000000e+00 : f32
      %65 = vector.broadcast %cst_34 : f32 to vector<128x128xf32>
      %66 = arith.maximumf %64, %65 : vector<128x128xf32>
      %c0_35 = arith.constant 0 : index
      %c0_36 = arith.constant 0 : index
      %67 = vector.load %arg5[%c0_35, %c0_36] : memref<128x128xf32, #tpu.memory_space<vmem>>, vector<128x128xf32>
      tpu.vector_store %arg5[%c0_35, %c0_36], %66 {strides = array<i32>} : memref<128x128xf32, #tpu.memory_space<vmem>>, vector<128x128xf32>,
    } else {
    }
    return
  }
  func.func @transform_0(%arg0: i32) -> (i32, i32) {
    %c0_i32 = arith.constant 0 : i32
    %c0_i32_0 = arith.constant 0 : i32
    return %arg0, %c0_i32 : i32, i32
  }
  func.func @transform_1(%arg0: i32) -> (i32, i32) {
    %c0_i32 = arith.constant 0 : i32
    %c0_i32_0 = arith.constant 0 : i32
    %c0_i32_1 = arith.constant 0 : i32
    return %c0_i32, %c0_i32_0 : i32, i32
  }
  func.func @transform_2(%arg0: i32) -> (i32, i32) {
    %c0_i32 = arith.constant 0 : i32
    %c0_i32_0 = arith.constant 0 : i32
    %c0_i32_1 = arith.constant 0 : i32
    return %c0_i32, %c0_i32_0 : i32, i32
  }
  func.func @transform_3(%arg0: i32) -> (i32, i32) {
    %c0_i32 = arith.constant 0 : i32
    %c0_i32_0 = arith.constant 0 : i32
    %c0_i32_1 = arith.constant 0 : i32
    return %c0_i32, %c0_i32_0 : i32, i32
  }
  func.func @transform_4(%arg0: i32) -> (i32, i32) {
    %c0_i32 = arith.constant 0 : i32
    %c0_i32_0 = arith.constant 0 : i32
    %c0_i32_1 = arith.constant 0 : i32
    return %c0_i32, %c0_i32_0 : i32, i32
  }
}

</mosaic_0001>

<llo_original>
// kernel: tpu_custom_call.1
$region0: #{tpu_custom_call.1}
  #allocation0 [shape = 'u32[]', space=smem, size = 0x4, offset = 0x4, fixed_abs, tag = 'smem constant byte address 0x4 - core index']
  #allocation1 [shape = 'u32[144,128]{1,0:T(1,128)}', space=vmem, size = 0x12000, scoped, tag = 'internal scratch']
  #allocation2 [shape = 'f32[512,128]{1,0:T(8,128)}', space=vmem, size = 0x40000, scoped, tag = 'scratch operand']
  #allocation3 [shape = 'f32[1,128]{1,0:T(1,128)}', space=vmem, size = 0x200, scoped, tag = 'scratch operand']
  #allocation4 [shape = 'f32[1,128]{1,0:T(1,128)}', space=vmem, size = 0x200, scoped, tag = 'scratch operand']
  %s0 = inlined_call_operand.vmem [shape: bf16[512,100], index: 0, kind: input, shape index: {}]
  %s1 = inlined_call_operand.vmem [shape: bf16[100,128], index: 1, kind: input, shape index: {}]
  %s2 = inlined_call_operand.vmem [shape: f32[1,128], index: 2, kind: input, shape index: {}]
  %s3 = inlined_call_operand.vmem [shape: f32[1,128], index: 3, kind: input, shape index: {}]
  %s4 = inlined_call_operand.hbm [shape: f32[128,128], index: 4, kind: output, shape index: {}]
  %s5 = sld [smem:[#allocation0]]
  $region34: #{tpu_custom_call.1} parent=0
    _
  %s7 = ssub.s32 1, %s5
  %s8 = scalar_select 0, %s7, %s5
  $region1: #{tpu_custom_call.1} parent=0
    #allocation5 [shape = 'u8[65536]{0}', space=vmem, size = 0x10000, scoped, tag = 'output window, operand 0, single buffered']
    #allocation6 [shape = 's32[1]{0}', space=sflag, size = 0x4, scoped, tag = 'scoped memory for tpu_custom_call.1']
    %9 = vsyncpa [#allocation6], 0
    // Predicated region
    $region2: #{tpu_custom_call.1} parent=1 // pred_check
      _
    $region3: #{tpu_custom_call.1} parent=1 // pred_check_branch
      %11 = sbr.rel (0) target = $region5
    $region4: #{tpu_custom_call.1} parent=1 // pred_region
      _
    $region5: #{tpu_custom_call.1} parent=1 // pred_fallthru
      _
    // Predicated region
    $region6: #{tpu_custom_call.1} parent=1 // pred_check
      _
    $region7: #{tpu_custom_call.1} parent=1 // pred_check_branch
      %13 = sbr.rel (0) target = $region9
    $region8: #{tpu_custom_call.1} parent=1 // pred_region
      _
    $region9: #{tpu_custom_call.1} parent=1 // pred_fallthru
      _
    // Predicated region
    $region10: #{tpu_custom_call.1} parent=1 // pred_check
      _
    $region11: #{tpu_custom_call.1} parent=1 // pred_check_branch
      %15 = sbr.rel (0) target = $region13
    $region12: #{tpu_custom_call.1} parent=1 // pred_region
      _
    $region13: #{tpu_custom_call.1} parent=1 // pred_fallthru
      _
    // Predicated region
    $region14: #{tpu_custom_call.1} parent=1 // pred_check
      _
    $region15: #{tpu_custom_call.1} parent=1 // pred_check_branch
      %17 = sbr.rel (0) target = $region17
    $region16: #{tpu_custom_call.1} parent=1 // pred_region
      _
    $region17: #{tpu_custom_call.1} parent=1 // pred_fallthru
      _
    %p19 = scmp.eq.s32.totalorder 0, 0
    // Predicated region
    $region18: #{tpu_custom_call.1} parent=1 // pred_check
      %p20 = pneg %p19
    $region19: #{tpu_custom_call.1} parent=1 // pred_check_branch
      %22 = sbr.rel (%p20) target = $region21
    $region20: #{tpu_custom_call.1} parent=1 // pred_region
      %23 = vst [vmem:[#allocation3] sm:$0x1] 0.0
      %24 = vst [vmem:[#allocation4] sm:$0x1] 0.0
    $region21: #{tpu_custom_call.1} parent=1 // pred_fallthru
      _
    %v25 = vld [vmem:[%s0] sm:$0xf]
    %v26 = vld [vmem:[%s0 + $0x4] sm:$0xf]
    %v27 = vld [vmem:[%s0 + $0x8] sm:$0xf]
    %v28 = vld [vmem:[%s0 + $0xc] sm:$0xf]
    %v29 = vld [vmem:[%s0 + $0x10] sm:$0xf]
    %v30 = vld [vmem:[%s0 + $0x14] sm:$0xf]
    %v31 = vld [vmem:[%s0 + $0x18] sm:$0xf]
    %v32 = vld [vmem:[%s0 + $0x1c] sm:$0xf]
    %v33 = vld [vmem:[%s0 + $0x20] sm:$0xf]
    %v34 = vld [vmem:[%s0 + $0x24] sm:$0xf]
    %v35 = vld [vmem:[%s0 + $0x28] sm:$0xf]
    %v36 = vld [vmem:[%s0 + $0x2c] sm:$0xf]
    %v37 = vld [vmem:[%s0 + $0x30] sm:$0xf]
    %v38 = vld [vmem:[%s0 + $0x34] sm:$0xf]
    %v39 = vld [vmem:[%s0 + $0x38] sm:$0xf]
    %v40 = vld [vmem:[%s0 + $0x3c] sm:$0xf]
    %v41 = vld [vmem:[%s0 + $0x40] sm:$0xf]
    %v42 = vld [vmem:[%s0 + $0x44] sm:$0xf]
    %v43 = vld [vmem:[%s0 + $0x48] sm:$0xf]
    %v44 = vld [vmem:[%s0 + $0x4c] sm:$0xf]
    %v45 = vld [vmem:[%s0 + $0x50] sm:$0xf]
    %v46 = vld [vmem:[%s0 + $0x54] sm:$0xf]
    %v47 = vld [vmem:[%s0 + $0x58] sm:$0xf]
    %v48 = vld [vmem:[%s0 + $0x5c] sm:$0xf]
    %v49 = vld [vmem:[%s0 + $0x60] sm:$0xf]
    %v50 = vld [vmem:[%s0 + $0x64] sm:$0xf]
    %v51 = vld [vmem:[%s0 + $0x68] sm:$0xf]
    %v52 = vld [vmem:[%s0 + $0x6c] sm:$0xf]
    %v53 = vld [vmem:[%s0 + $0x70] sm:$0xf]
    %v54 = vld [vmem:[%s0 + $0x74] sm:$0xf]
    %v55 = vld [vmem:[%s0 + $0x78] sm:$0xf]
    %v56 = vld [vmem:[%s0 + $0x7c] sm:$0xf]
    %v57 = vld [vmem:[%s0 + $0x80] sm:$0xf]
    %v58 = vld [vmem:[%s0 + $0x84] sm:$0xf]
    %v59 = vld [vmem:[%s0 + $0x88] sm:$0xf]
    %v60 = vld [vmem:[%s0 + $0x8c] sm:$0xf]
    %v61 = vld [vmem:[%s0 + $0x90] sm:$0xf]
    %v62 = vld [vmem:[%s0 + $0x94] sm:$0xf]
    %v63 = vld [vmem:[%s0 + $0x98] sm:$0xf]
    %v64 = vld [vmem:[%s0 + $0x9c] sm:$0xf]
    %v65 = vld [vmem:[%s0 + $0xa0] sm:$0xf]
    %v66 = vld [vmem:[%s0 + $0xa4] sm:$0xf]
    %v67 = vld [vmem:[%s0 + $0xa8] sm:$0xf]
    %v68 = vld [vmem:[%s0 + $0xac] sm:$0xf]
    %v69 = vld [vmem:[%s0 + $0xb0] sm:$0xf]
    %v70 = vld [vmem:[%s0 + $0xb4] sm:$0xf]
    %v71 = vld [vmem:[%s0 + $0xb8] sm:$0xf]
    %v72 = vld [vmem:[%s0 + $0xbc] sm:$0xf]
    %v73 = vld [vmem:[%s0 + $0xc0] sm:$0xf]
    %v74 = vld [vmem:[%s0 + $0xc4] sm:$0xf]
    %v75 = vld [vmem:[%s0 + $0xc8] sm:$0xf]
    %v76 = vld [vmem:[%s0 + $0xcc] sm:$0xf]
    %v77 = vld [vmem:[%s0 + $0xd0] sm:$0xf]
    %v78 = vld [vmem:[%s0 + $0xd4] sm:$0xf]
    %v79 = vld [vmem:[%s0 + $0xd8] sm:$0xf]
    %v80 = vld [vmem:[%s0 + $0xdc] sm:$0xf]
    %v81 = vld [vmem:[%s0 + $0xe0] sm:$0xf]
    %v82 = vld [vmem:[%s0 + $0xe4] sm:$0xf]
    %v83 = vld [vmem:[%s0 + $0xe8] sm:$0xf]
    %v84 = vld [vmem:[%s0 + $0xec] sm:$0xf]
    %v85 = vld [vmem:[%s0 + $0xf0] sm:$0xf]
    %v86 = vld [vmem:[%s0 + $0xf4] sm:$0xf]
    %v87 = vld [vmem:[%s0 + $0xf8] sm:$0xf]
    %v88 = vld [vmem:[%s0 + $0xfc] sm:$0xf]
    %v89 = vld [vmem:[%s1] sm:$0xf]
    %v90 = vld [vmem:[%s1 + $0x4] sm:$0xf]
    %v91 = vld [vmem:[%s1 + $0x8] sm:$0xf]
    %v92 = vld [vmem:[%s1 + $0xc] sm:$0xf]
    %v93 = vld [vmem:[%s1 + $0x10] sm:$0xf]
    %v94 = vld [vmem:[%s1 + $0x14] sm:$0xf]
    %v95 = vld [vmem:[%s1 + $0x18] sm:$0xf]
    %v96 = vld [vmem:[%s1 + $0x1c] sm:$0xf]
    %v97 = vld [vmem:[%s1 + $0x20] sm:$0xf]
    %v98 = vld [vmem:[%s1 + $0x24] sm:$0xf]
    %v99 = vld [vmem:[%s1 + $0x28] sm:$0xf]
    %v100 = vld [vmem:[%s1 + $0x2c] sm:$0xf]
    %v101 = vld [vmem:[%s1 + $0x30] sm:$0x3]
    %v166 = vunpack.c.l.b16 %v25
    %v167 = vunpack.c.l.b16 %v26
    %v168 = vunpack.c.l.b16 %v27
    %v169 = vunpack.c.l.b16 %v28
    %v170 = vunpack.c.l.b16 %v29
    %v171 = vunpack.c.l.b16 %v30
    %v172 = vunpack.c.l.b16 %v31
    %v173 = vunpack.c.l.b16 %v32
    %v174 = vunpack.c.l.b16 %v33
    %v175 = vunpack.c.l.b16 %v34
    %v176 = vunpack.c.l.b16 %v35
    %v177 = vunpack.c.l.b16 %v36
    %v178 = vunpack.c.l.b16 %v37
    %v179 = vunpack.c.l.b16 %v38
    %v180 = vunpack.c.l.b16 %v39
    %v181 = vunpack.c.l.b16 %v40
    %v182 = vunpack.c.l.b16 %v41
    %v183 = vunpack.c.l.b16 %v42
    %v184 = vunpack.c.l.b16 %v43
    %v185 = vunpack.c.l.b16 %v44
    %v186 = vunpack.c.l.b16 %v45
    %v187 = vunpack.c.l.b16 %v46
    %v188 = vunpack.c.l.b16 %v47
    %v189 = vunpack.c.l.b16 %v48
    %v190 = vunpack.c.l.b16 %v49
    %v191 = vunpack.c.l.b16 %v50
    %v192 = vunpack.c.l.b16 %v51
    %v193 = vunpack.c.l.b16 %v52
    %v194 = vunpack.c.l.b16 %v53
    %v195 = vunpack.c.l.b16 %v54
    %v196 = vunpack.c.l.b16 %v55
    %v197 = vunpack.c.l.b16 %v56
    %v198 = vunpack.c.l.b16 %v57
    %v199 = vunpack.c.l.b16 %v58
    %v200 = vunpack.c.l.b16 %v59
    %v201 = vunpack.c.l.b16 %v60
    %v202 = vunpack.c.l.b16 %v61
    %v203 = vunpack.c.l.b16 %v62
    %v204 = vunpack.c.l.b16 %v63
    %v205 = vunpack.c.l.b16 %v64
    %v206 = vunpack.c.l.b16 %v65
    %v207 = vunpack.c.l.b16 %v66
    %v208 = vunpack.c.l.b16 %v67
    %v209 = vunpack.c.l.b16 %v68
    %v210 = vunpack.c.l.b16 %v69
    %v211 = vunpack.c.l.b16 %v70
    %v212 = vunpack.c.l.b16 %v71
    %v213 = vunpack.c.l.b16 %v72
    %v214 = vunpack.c.l.b16 %v73
    %v215 = vunpack.c.l.b16 %v74
    %v216 = vunpack.c.l.b16 %v75
    %v217 = vunpack.c.l.b16 %v76
    %v218 = vunpack.c.l.b16 %v77
    %v219 = vunpack.c.l.b16 %v78
    %v220 = vunpack.c.l.b16 %v79
    %v221 = vunpack.c.l.b16 %v80
    %v222 = vunpack.c.l.b16 %v81
    %v223 = vunpack.c.l.b16 %v82
    %v224 = vunpack.c.l.b16 %v83
    %v225 = vunpack.c.l.b16 %v84
    %v226 = vunpack.c.l.b16 %v85
    %v227 = vunpack.c.l.b16 %v86
    %v228 = vunpack.c.l.b16 %v87
    %v229 = vunpack.c.l.b16 %v88
    %v230 = vpack.c.b16 %v167, %v166
    %v231 = vpack.c.b16 %v169, %v168
    %v232 = vpack.c.b16 %v171, %v170
    %v233 = vpack.c.b16 %v173, %v172
    %v234 = vpack.c.b16 %v175, %v174
    %v235 = vpack.c.b16 %v177, %v176
    %v236 = vpack.c.b16 %v179, %v178
    %v237 = vpack.c.b16 %v181, %v180
    %v238 = vpack.c.b16 %v183, %v182
    %v239 = vpack.c.b16 %v185, %v184
    %v240 = vpack.c.b16 %v187, %v186
    %v241 = vpack.c.b16 %v189, %v188
    %v242 = vpack.c.b16 %v191, %v190
    %v243 = vpack.c.b16 %v193, %v192
    %v244 = vpack.c.b16 %v195, %v194
    %v245 = vpack.c.b16 %v197, %v196
    %v246 = vpack.c.b16 %v199, %v198
    %v247 = vpack.c.b16 %v201, %v200
    %v248 = vpack.c.b16 %v203, %v202
    %v249 = vpack.c.b16 %v205, %v204
    %v250 = vpack.c.b16 %v207, %v206
    %v251 = vpack.c.b16 %v209, %v208
    %v252 = vpack.c.b16 %v211, %v210
    %v253 = vpack.c.b16 %v213, %v212
    %v254 = vpack.c.b16 %v215, %v214
    %v255 = vpack.c.b16 %v217, %v216
    %v256 = vpack.c.b16 %v219, %v218
    %v257 = vpack.c.b16 %v221, %v220
    %v258 = vpack.c.b16 %v223, %v222
    %v259 = vpack.c.b16 %v225, %v224
    %v260 = vpack.c.b16 %v227, %v226
    %v261 = vpack.c.b16 %v229, %v228
    %v275 = vunpack.c.l.b16 %v89
    %v276 = vunpack.c.l.b16 %v90
    %v277 = vunpack.c.l.b16 %v91
    %v278 = vunpack.c.l.b16 %v92
    %v279 = vunpack.c.l.b16 %v93
    %v280 = vunpack.c.l.b16 %v94
    %v281 = vunpack.c.l.b16 %v95
    %v282 = vunpack.c.l.b16 %v96
    %v283 = vunpack.c.l.b16 %v97
    %v284 = vunpack.c.l.b16 %v98
    %v285 = vunpack.c.l.b16 %v99
    %v286 = vunpack.c.l.b16 %v100
    %v287 = vunpack.c.l.b16 %v101
    %v288 = vpack.c.b16 %v276, %v275
    %v289 = vpack.c.b16 %v278, %v277
    %v290 = vpack.c.b16 %v280, %v279
    %v291 = vpack.c.b16 %v282, %v281
    %v292 = vpack.c.b16 %v284, %v283
    %v293 = vpack.c.b16 %v286, %v285
    %v294 = vpack.c.b16 %v287, %v287
    %vm301 = vcmask 818176
    %v303 = vsel %vm301, %v230, 0
    %v306 = vsel %vm301, %v231, 0
    %v309 = vsel %vm301, %v232, 0
    %v312 = vsel %vm301, %v233, 0
    %v315 = vsel %vm301, %v234, 0
    %v318 = vsel %vm301, %v235, 0
    %v321 = vsel %vm301, %v236, 0
    %v324 = vsel %vm301, %v237, 0
    %v327 = vsel %vm301, %v238, 0
    %v330 = vsel %vm301, %v239, 0
    %v333 = vsel %vm301, %v240, 0
    %v336 = vsel %vm301, %v241, 0
    %v339 = vsel %vm301, %v242, 0
    %v342 = vsel %vm301, %v243, 0
    %v345 = vsel %vm301, %v244, 0
    %v348 = vsel %vm301, %v245, 0
    %v351 = vsel %vm301, %v246, 0
    %v354 = vsel %vm301, %v247, 0
    %v357 = vsel %vm301, %v248, 0
    %v360 = vsel %vm301, %v249, 0
    %v363 = vsel %vm301, %v250, 0
    %v366 = vsel %vm301, %v251, 0
    %v369 = vsel %vm301, %v252, 0
    %v372 = vsel %vm301, %v253, 0
    %v375 = vsel %vm301, %v254, 0
    %v378 = vsel %vm301, %v255, 0
    %v381 = vsel %vm301, %v256, 0
    %v384 = vsel %vm301, %v257, 0
    %v387 = vsel %vm301, %v258, 0
    %v390 = vsel %vm301, %v259, 0
    %v393 = vsel %vm301, %v260, 0
    %v396 = vsel %vm301, %v261, 0
    %vm398 = vcmask 1041408
    %v400 = vsel %vm398, %v294, 0
    %402 = vmatprep.subr.bf16.mxu0 0
    %403 = vmatpush1.bf16.msra.mxu0 %v288
    %404 = vmatprep.subr.bf16.mxu0 0
    %405 = vmatpush1.bf16.msra.mxu0 %v289
    %406 = vmatprep.subr.bf16.mxu0 0
    %407 = vmatpush1.bf16.msra.mxu0 %v290
    %408 = vmatprep.subr.bf16.mxu0 0
    %409 = vmatpush1.bf16.msra.mxu0 %v291
    %410 = vmatprep.subr.bf16.mxu0 0
    %411 = vmatpush1.bf16.msra.mxu0 %v292
    %412 = vmatprep.subr.bf16.mxu0 0
    %413 = vmatpush1.bf16.msra.mxu0 %v293
    %414 = vmatprep.subr.bf16.mxu0 0
    %415 = vmatpush1.bf16.msra.mxu0 %v400
    %416 = vmatprep.subr.bf16.mxu0 0
    %417 = vmatpush1.bf16.msra.mxu0 0
    %418 = vmatprep.subr.bf16.mxu0 0
    %419 = vmatpush1.bf16.msra.mxu0 0
    %420 = vmatprep.subr.bf16.mxu0 0
    %421 = vmatpush1.bf16.msra.mxu0 0
    %422 = vmatprep.subr.bf16.mxu0 0
    %423 = vmatpush1.bf16.msra.mxu0 0
    %424 = vmatprep.subr.bf16.mxu0 0
    %425 = vmatpush1.bf16.msra.mxu0 0
    %426 = vmatprep.subr.bf16.mxu0 0
    %427 = vmatpush1.bf16.msra.mxu0 0
    %428 = vmatprep.subr.bf16.mxu0 0
    %429 = vmatpush1.bf16.msra.mxu0 0
    %430 = vmatprep.subr.bf16.mxu0 0
    %431 = vmatpush1.bf16.msra.mxu0 0
    %432 = vmatprep.subr.bf16.mxu0 0
    %433 = vmatpush1.bf16.msra.mxu0 0
    %434 = vmatprep.mubr.bf16.mxu0 0
    %435 = vmatmul.mubr.bf16.gmra.mrb[0].mxu0 %v303
    %v436 = vpop.f32.mrb[0].mxu0
    %v437 = vadd.f32 0.0, %v436
    %v438 = vpop.f32.mrb[0].mxu0
    %v439 = vpop.f32.mrb[0].mxu0
    %v440 = vadd.f32 0.0, %v439
    %v441 = vpop.f32.mrb[0].mxu0
    %442 = vmatprep.mubr.bf16.mxu0 0
    %443 = vmatmul.mubr.bf16.gmra.mrb[0].mxu0 %v306
    %v444 = vpop.f32.mrb[0].mxu0
    %v445 = vadd.f32 0.0, %v444
    %v446 = vpop.f32.mrb[0].mxu0
    %v447 = vpop.f32.mrb[0].mxu0
    %v448 = vadd.f32 0.0, %v447
    %v449 = vpop.f32.mrb[0].mxu0
    %450 = vmatprep.mubr.bf16.mxu0 0
    %451 = vmatmul.mubr.bf16.gmra.mrb[0].mxu0 %v309
    %v452 = vpop.f32.mrb[0].mxu0
    %v453 = vadd.f32 0.0, %v452
    %v454 = vpop.f32.mrb[0].mxu0
    %v455 = vpop.f32.mrb[0].mxu0
    %v456 = vadd.f32 0.0, %v455
    %v457 = vpop.f32.mrb[0].mxu0
    %458 = vmatprep.mubr.bf16.mxu0 0
    %459 = vmatmul.mubr.bf16.gmra.mrb[0].mxu0 %v312
    %v460 = vpop.f32.mrb[0].mxu0
    %v461 = vadd.f32 0.0, %v460
    %v462 = vpop.f32.mrb[0].mxu0
    %v463 = vpop.f32.mrb[0].mxu0
    %v464 = vadd.f32 0.0, %v463
    %v465 = vpop.f32.mrb[0].mxu0
    %466 = vmatprep.mubr.bf16.mxu0 0
    %467 = vmatmul.mubr.bf16.gmra.mrb[0].mxu0 %v315
    %v468 = vpop.f32.mrb[0].mxu0
    %v469 = vadd.f32 0.0, %v468
    %v470 = vpop.f32.mrb[0].mxu0
    %v471 = vpop.f32.mrb[0].mxu0
    %v472 = vadd.f32 0.0, %v471
    %v473 = vpop.f32.mrb[0].mxu0
    %474 = vmatprep.mubr.bf16.mxu0 0
    %475 = vmatmul.mubr.bf16.gmra.mrb[0].mxu0 %v318
    %v476 = vpop.f32.mrb[0].mxu0
    %v477 = vadd.f32 0.0, %v476
    %v478 = vpop.f32.mrb[0].mxu0
    %v479 = vpop.f32.mrb[0].mxu0
    %v480 = vadd.f32 0.0, %v479
    %v481 = vpop.f32.mrb[0].mxu0
    %482 = vmatprep.mubr.bf16.mxu0 0
    %483 = vmatmul.mubr.bf16.gmra.mrb[0].mxu0 %v321
    %v484 = vpop.f32.mrb[0].mxu0
    %v485 = vadd.f32 0.0, %v484
    %v486 = vpop.f32.mrb[0].mxu0
    %v487 = vpop.f32.mrb[0].mxu0
    %v488 = vadd.f32 0.0, %v487
    %v489 = vpop.f32.mrb[0].mxu0
    %490 = vmatprep.mubr.bf16.mxu0 0
    %491 = vmatmul.mubr.bf16.gmra.mrb[0].mxu0 %v324
    %v492 = vpop.f32.mrb[0].mxu0
    %v493 = vadd.f32 0.0, %v492
    %v494 = vpop.f32.mrb[0].mxu0
    %v495 = vpop.f32.mrb[0].mxu0
    %v496 = vadd.f32 0.0, %v495
    %v497 = vpop.f32.mrb[0].mxu0
    %498 = vmatprep.mubr.bf16.mxu0 0
    %499 = vmatmul.mubr.bf16.gmra.mrb[0].mxu0 %v327
    %v500 = vpop.f32.mrb[0].mxu0
    %v501 = vadd.f32 0.0, %v500
    %v502 = vpop.f32.mrb[0].mxu0
    %v503 = vpop.f32.mrb[0].mxu0
    %v504 = vadd.f32 0.0, %v503
    %v505 = vpop.f32.mrb[0].mxu0
    %506 = vmatprep.mubr.bf16.mxu0 0
    %507 = vmatmul.mubr.bf16.gmra.mrb[0].mxu0 %v330
    %v508 = vpop.f32.mrb[0].mxu0
    %v509 = vadd.f32 0.0, %v508
    %v510 = vpop.f32.mrb[0].mxu0
    %v511 = vpop.f32.mrb[0].mxu0
    %v512 = vadd.f32 0.0, %v511
    %v513 = vpop.f32.mrb[0].mxu0
    %514 = vmatprep.mubr.bf16.mxu0 0
    %515 = vmatmul.mubr.bf16.gmra.mrb[0].mxu0 %v333
    %v516 = vpop.f32.mrb[0].mxu0
    %v517 = vadd.f32 0.0, %v516
    %v518 = vpop.f32.mrb[0].mxu0
    %v519 = vpop.f32.mrb[0].mxu0
    %v520 = vadd.f32 0.0, %v519
    %v521 = vpop.f32.mrb[0].mxu0
    %522 = vmatprep.mubr.bf16.mxu0 0
    %523 = vmatmul.mubr.bf16.gmra.mrb[0].mxu0 %v336
    %v524 = vpop.f32.mrb[0].mxu0
    %v525 = vadd.f32 0.0, %v524
    %v526 = vpop.f32.mrb[0].mxu0
    %v527 = vpop.f32.mrb[0].mxu0
    %v528 = vadd.f32 0.0, %v527
    %v529 = vpop.f32.mrb[0].mxu0
    %530 = vmatprep.mubr.bf16.mxu0 0
    %531 = vmatmul.mubr.bf16.gmra.mrb[0].mxu0 %v339
    %v532 = vpop.f32.mrb[0].mxu0
    %v533 = vadd.f32 0.0, %v532
    %v534 = vpop.f32.mrb[0].mxu0
    %v535 = vpop.f32.mrb[0].mxu0
    %v536 = vadd.f32 0.0, %v535
    %v537 = vpop.f32.mrb[0].mxu0
    %538 = vmatprep.mubr.bf16.mxu0 0
    %539 = vmatmul.mubr.bf16.gmra.mrb[0].mxu0 %v342
    %v540 = vpop.f32.mrb[0].mxu0
    %v541 = vadd.f32 0.0, %v540
    %v542 = vpop.f32.mrb[0].mxu0
    %v543 = vpop.f32.mrb[0].mxu0
    %v544 = vadd.f32 0.0, %v543
    %v545 = vpop.f32.mrb[0].mxu0
    %546 = vmatprep.mubr.bf16.mxu0 0
    %547 = vmatmul.mubr.bf16.gmra.mrb[0].mxu0 %v345
    %v548 = vpop.f32.mrb[0].mxu0
    %v549 = vadd.f32 0.0, %v548
    %v550 = vpop.f32.mrb[0].mxu0
    %v551 = vpop.f32.mrb[0].mxu0
    %v552 = vadd.f32 0.0, %v551
    %v553 = vpop.f32.mrb[0].mxu0
    %554 = vmatprep.mubr.bf16.mxu0 0
    %555 = vmatmul.mubr.bf16.gmra.mrb[0].mxu0 %v348
    %v556 = vpop.f32.mrb[0].mxu0
    %v557 = vadd.f32 0.0, %v556
    %v558 = vpop.f32.mrb[0].mxu0
    %v559 = vpop.f32.mrb[0].mxu0
    %v560 = vadd.f32 0.0, %v559
    %v561 = vpop.f32.mrb[0].mxu0
    %562 = vmatprep.mubr.bf16.mxu0 0
    %563 = vmatmul.mubr.bf16.gmra.mrb[0].mxu0 %v351
    %v564 = vpop.f32.mrb[0].mxu0
    %v565 = vadd.f32 0.0, %v564
    %v566 = vpop.f32.mrb[0].mxu0
    %v567 = vpop.f32.mrb[0].mxu0
    %v568 = vadd.f32 0.0, %v567
    %v569 = vpop.f32.mrb[0].mxu0
    %570 = vmatprep.mubr.bf16.mxu0 0
    %571 = vmatmul.mubr.bf16.gmra.mrb[0].mxu0 %v354
    %v572 = vpop.f32.mrb[0].mxu0
    %v573 = vadd.f32 0.0, %v572
    %v574 = vpop.f32.mrb[0].mxu0
    %v575 = vpop.f32.mrb[0].mxu0
    %v576 = vadd.f32 0.0, %v575
    %v577 = vpop.f32.mrb[0].mxu0
    %578 = vmatprep.mubr.bf16.mxu0 0
    %579 = vmatmul.mubr.bf16.gmra.mrb[0].mxu0 %v357
    %v580 = vpop.f32.mrb[0].mxu0
    %v581 = vadd.f32 0.0, %v580
    %v582 = vpop.f32.mrb[0].mxu0
    %v583 = vpop.f32.mrb[0].mxu0
    %v584 = vadd.f32 0.0, %v583
    %v585 = vpop.f32.mrb[0].mxu0
    %586 = vmatprep.mubr.bf16.mxu0 0
    %587 = vmatmul.mubr.bf16.gmra.mrb[0].mxu0 %v360
    %v588 = vpop.f32.mrb[0].mxu0
    %v589 = vadd.f32 0.0, %v588
    %v590 = vpop.f32.mrb[0].mxu0
    %v591 = vpop.f32.mrb[0].mxu0
    %v592 = vadd.f32 0.0, %v591
    %v593 = vpop.f32.mrb[0].mxu0
    %594 = vmatprep.mubr.bf16.mxu0 0
    %595 = vmatmul.mubr.bf16.gmra.mrb[0].mxu0 %v363
    %v596 = vpop.f32.mrb[0].mxu0
    %v597 = vadd.f32 0.0, %v596
    %v598 = vpop.f32.mrb[0].mxu0
    %v599 = vpop.f32.mrb[0].mxu0
    %v600 = vadd.f32 0.0, %v599
    %v601 = vpop.f32.mrb[0].mxu0
    %602 = vmatprep.mubr.bf16.mxu0 0
    %603 = vmatmul.mubr.bf16.gmra.mrb[0].mxu0 %v366
    %v604 = vpop.f32.mrb[0].mxu0
    %v605 = vadd.f32 0.0, %v604
    %v606 = vpop.f32.mrb[0].mxu0
    %v607 = vpop.f32.mrb[0].mxu0
    %v608 = vadd.f32 0.0, %v607
    %v609 = vpop.f32.mrb[0].mxu0
    %610 = vmatprep.mubr.bf16.mxu0 0
    %611 = vmatmul.mubr.bf16.gmra.mrb[0].mxu0 %v369
    %v612 = vpop.f32.mrb[0].mxu0
    %v613 = vadd.f32 0.0, %v612
    %v614 = vpop.f32.mrb[0].mxu0
    %v615 = vpop.f32.mrb[0].mxu0
    %v616 = vadd.f32 0.0, %v615
    %v617 = vpop.f32.mrb[0].mxu0
    %618 = vmatprep.mubr.bf16.mxu0 0
    %619 = vmatmul.mubr.bf16.gmra.mrb[0].mxu0 %v372
    %v620 = vpop.f32.mrb[0].mxu0
    %v621 = vadd.f32 0.0, %v620
    %v622 = vpop.f32.mrb[0].mxu0
    %v623 = vpop.f32.mrb[0].mxu0
    %v624 = vadd.f32 0.0, %v623
    %v625 = vpop.f32.mrb[0].mxu0
    %626 = vmatprep.mubr.bf16.mxu0 0
    %627 = vmatmul.mubr.bf16.gmra.mrb[0].mxu0 %v375
    %v628 = vpop.f32.mrb[0].mxu0
    %v629 = vadd.f32 0.0, %v628
    %v630 = vpop.f32.mrb[0].mxu0
    %v631 = vpop.f32.mrb[0].mxu0
    %v632 = vadd.f32 0.0, %v631
    %v633 = vpop.f32.mrb[0].mxu0
    %634 = vmatprep.mubr.bf16.mxu0 0
    %635 = vmatmul.mubr.bf16.gmra.mrb[0].mxu0 %v378
    %v636 = vpop.f32.mrb[0].mxu0
    %v637 = vadd.f32 0.0, %v636
    %v638 = vpop.f32.mrb[0].mxu0
    %v639 = vpop.f32.mrb[0].mxu0
    %v640 = vadd.f32 0.0, %v639
    %v641 = vpop.f32.mrb[0].mxu0
    %642 = vmatprep.mubr.bf16.mxu0 0
    %643 = vmatmul.mubr.bf16.gmra.mrb[0].mxu0 %v381
    %v644 = vpop.f32.mrb[0].mxu0
    %v645 = vadd.f32 0.0, %v644
    %v646 = vpop.f32.mrb[0].mxu0
    %v647 = vpop.f32.mrb[0].mxu0
    %v648 = vadd.f32 0.0, %v647
    %v649 = vpop.f32.mrb[0].mxu0
    %650 = vmatprep.mubr.bf16.mxu0 0
    %651 = vmatmul.mubr.bf16.gmra.mrb[0].mxu0 %v384
    %v652 = vpop.f32.mrb[0].mxu0
    %v653 = vadd.f32 0.0, %v652
    %v654 = vpop.f32.mrb[0].mxu0
    %v655 = vpop.f32.mrb[0].mxu0
    %v656 = vadd.f32 0.0, %v655
    %v657 = vpop.f32.mrb[0].mxu0
    %658 = vmatprep.mubr.bf16.mxu0 0
    %659 = vmatmul.mubr.bf16.gmra.mrb[0].mxu0 %v387
    %v660 = vpop.f32.mrb[0].mxu0
    %v661 = vadd.f32 0.0, %v660
    %v662 = vpop.f32.mrb[0].mxu0
    %v663 = vpop.f32.mrb[0].mxu0
    %v664 = vadd.f32 0.0, %v663
    %v665 = vpop.f32.mrb[0].mxu0
    %666 = vmatprep.mubr.bf16.mxu0 0
    %667 = vmatmul.mubr.bf16.gmra.mrb[0].mxu0 %v390
    %v668 = vpop.f32.mrb[0].mxu0
    %v669 = vadd.f32 0.0, %v668
    %v670 = vpop.f32.mrb[0].mxu0
    %v671 = vpop.f32.mrb[0].mxu0
    %v672 = vadd.f32 0.0, %v671
    %v673 = vpop.f32.mrb[0].mxu0
    %674 = vmatprep.mubr.bf16.mxu0 0
    %675 = vmatmul.mubr.bf16.gmra.mrb[0].mxu0 %v393
    %v676 = vpop.f32.mrb[0].mxu0
    %v677 = vadd.f32 0.0, %v676
    %v678 = vpop.f32.mrb[0].mxu0
    %v679 = vpop.f32.mrb[0].mxu0
    %v680 = vadd.f32 0.0, %v679
    %v681 = vpop.f32.mrb[0].mxu0
    %682 = vmatprep.mubr.bf16.mxu0 0
    %683 = vmatmul.mubr.bf16.gmra.mrb[0].mxu0 %v396
    %v684 = vpop.f32.mrb[0].mxu0
    %v685 = vadd.f32 0.0, %v684
    %v686 = vpop.f32.mrb[0].mxu0
    %v687 = vpop.f32.mrb[0].mxu0
    %v688 = vadd.f32 0.0, %v687
    %v689 = vpop.f32.mrb[0].mxu0
    %690 = vdwg.mxu0
    %s691 = smul.u32 0, 512
    %s692 = scalar_lea.vmem [#allocation2], %s691
    %693 = vst [vmem:[%s692] sm:$0xff] %v437
    %694 = vst [vmem:[%s692 + $0x8] sm:$0xff] %v440
    %695 = vst [vmem:[%s692 + $0x10] sm:$0xff] %v445
    %696 = vst [vmem:[%s692 + $0x18] sm:$0xff] %v448
    %697 = vst [vmem:[%s692 + $0x20] sm:$0xff] %v453
    %698 = vst [vmem:[%s692 + $0x28] sm:$0xff] %v456
    %699 = vst [vmem:[%s692 + $0x30] sm:$0xff] %v461
    %700 = vst [vmem:[%s692 + $0x38] sm:$0xff] %v464
    %701 = vst [vmem:[%s692 + $0x40] sm:$0xff] %v469
    %702 = vst [vmem:[%s692 + $0x48] sm:$0xff] %v472
    %703 = vst [vmem:[%s692 + $0x50] sm:$0xff] %v477
    %704 = vst [vmem:[%s692 + $0x58] sm:$0xff] %v480
    %705 = vst [vmem:[%s692 + $0x60] sm:$0xff] %v485
    %706 = vst [vmem:[%s692 + $0x68] sm:$0xff] %v488
    %707 = vst [vmem:[%s692 + $0x70] sm:$0xff] %v493
    %708 = vst [vmem:[%s692 + $0x78] sm:$0xff] %v496
    %709 = vst [vmem:[%s692 + $0x80] sm:$0xff] %v501
    %710 = vst [vmem:[%s692 + $0x88] sm:$0xff] %v504
    %711 = vst [vmem:[%s692 + $0x90] sm:$0xff] %v509
    %712 = vst [vmem:[%s692 + $0x98] sm:$0xff] %v512
    %713 = vst [vmem:[%s692 + $0xa0] sm:$0xff] %v517
    %714 = vst [vmem:[%s692 + $0xa8] sm:$0xff] %v520
    %715 = vst [vmem:[%s692 + $0xb0] sm:$0xff] %v525
    %716 = vst [vmem:[%s692 + $0xb8] sm:$0xff] %v528
    %717 = vst [vmem:[%s692 + $0xc0] sm:$0xff] %v533
    %718 = vst [vmem:[%s692 + $0xc8] sm:$0xff] %v536
    %719 = vst [vmem:[%s692 + $0xd0] sm:$0xff] %v541
    %720 = vst [vmem:[%s692 + $0xd8] sm:$0xff] %v544
    %721 = vst [vmem:[%s692 + $0xe0] sm:$0xff] %v549
    %722 = vst [vmem:[%s692 + $0xe8] sm:$0xff] %v552
    %723 = vst [vmem:[%s692 + $0xf0] sm:$0xff] %v557
    %724 = vst [vmem:[%s692 + $0xf8] sm:$0xff] %v560
    %725 = vst [vmem:[%s692 + $0x100] sm:$0xff] %v565
    %726 = vst [vmem:[%s692 + $0x108] sm:$0xff] %v568
    %727 = vst [vmem:[%s692 + $0x110] sm:$0xff] %v573
    %728 = vst [vmem:[%s692 + $0x118] sm:$0xff] %v576
    %729 = vst [vmem:[%s692 + $0x120] sm:$0xff] %v581
    %730 = vst [vmem:[%s692 + $0x128] sm:$0xff] %v584
    %731 = vst [vmem:[%s692 + $0x130] sm:$0xff] %v589
    %732 = vst [vmem:[%s692 + $0x138] sm:$0xff] %v592
    %733 = vst [vmem:[%s692 + $0x140] sm:$0xff] %v597
    %734 = vst [vmem:[%s692 + $0x148] sm:$0xff] %v600
    %735 = vst [vmem:[%s692 + $0x150] sm:$0xff] %v605
    %736 = vst [vmem:[%s692 + $0x158] sm:$0xff] %v608
    %737 = vst [vmem:[%s692 + $0x160] sm:$0xff] %v613
    %738 = vst [vmem:[%s692 + $0x168] sm:$0xff] %v616
    %739 = vst [vmem:[%s692 + $0x170] sm:$0xff] %v621
    %740 = vst [vmem:[%s692 + $0x178] sm:$0xff] %v624
    %741 = vst [vmem:[%s692 + $0x180] sm:$0xff] %v629
    %742 = vst [vmem:[%s692 + $0x188] sm:$0xff] %v632
    %743 = vst [vmem:[%s692 + $0x190] sm:$0xff] %v637
    %744 = vst [vmem:[%s692 + $0x198] sm:$0xff] %v640
    %745 = vst [vmem:[%s692 + $0x1a0] sm:$0xff] %v645
    %746 = vst [vmem:[%s692 + $0x1a8] sm:$0xff] %v648
    %747 = vst [vmem:[%s692 + $0x1b0] sm:$0xff] %v653
    %748 = vst [vmem:[%s692 + $0x1b8] sm:$0xff] %v656
    %749 = vst [vmem:[%s692 + $0x1c0] sm:$0xff] %v661
    %750 = vst [vmem:[%s692 + $0x1c8] sm:$0xff] %v664
    %751 = vst [vmem:[%s692 + $0x1d0] sm:$0xff] %v669
    %752 = vst [vmem:[%s692 + $0x1d8] sm:$0xff] %v672
    %753 = vst [vmem:[%s692 + $0x1e0] sm:$0xff] %v677
    %754 = vst [vmem:[%s692 + $0x1e8] sm:$0xff] %v680
    %755 = vst [vmem:[%s692 + $0x1f0] sm:$0xff] %v685
    %756 = vst [vmem:[%s692 + $0x1f8] sm:$0xff] %v688
    %v757 = vld [vmem:[#allocation3] sm:$0x1]
    %v758 = vadd.f32 %v437, %v440
    %v759 = vadd.f32 %v758, %v445
    %v760 = vadd.f32 %v759, %v448
    %v761 = vadd.f32 %v760, %v453
    %v762 = vadd.f32 %v761, %v456
    %v763 = vadd.f32 %v762, %v461
    %v764 = vadd.f32 %v763, %v464
    %v765 = vadd.f32 %v764, %v469
    %v766 = vadd.f32 %v765, %v472
    %v767 = vadd.f32 %v766, %v477
    %v768 = vadd.f32 %v767, %v480
    %v769 = vadd.f32 %v768, %v485
    %v770 = vadd.f32 %v769, %v488
    %v771 = vadd.f32 %v770, %v493
    %v772 = vadd.f32 %v771, %v496
    %v773 = vadd.f32 %v772, %v501
    %v774 = vadd.f32 %v773, %v504
    %v775 = vadd.f32 %v774, %v509
    %v776 = vadd.f32 %v775, %v512
    %v777 = vadd.f32 %v776, %v517
    %v778 = vadd.f32 %v777, %v520
    %v779 = vadd.f32 %v778, %v525
    %v780 = vadd.f32 %v779, %v528
    %v781 = vadd.f32 %v780, %v533
    %v782 = vadd.f32 %v781, %v536
    %v783 = vadd.f32 %v782, %v541
    %v784 = vadd.f32 %v783, %v544
    %v785 = vadd.f32 %v784, %v549
    %v786 = vadd.f32 %v785, %v552
    %v787 = vadd.f32 %v786, %v557
    %v788 = vadd.f32 %v787, %v560
    %v789 = vadd.f32 %v788, %v565
    %v790 = vadd.f32 %v789, %v568
    %v791 = vadd.f32 %v790, %v573
    %v792 = vadd.f32 %v791, %v576
    %v793 = vadd.f32 %v792, %v581
    %v794 = vadd.f32 %v793, %v584
    %v795 = vadd.f32 %v794, %v589
    %v796 = vadd.f32 %v795, %v592
    %v797 = vadd.f32 %v796, %v597
    %v798 = vadd.f32 %v797, %v600
    %v799 = vadd.f32 %v798, %v605
    %v800 = vadd.f32 %v799, %v608
    %v801 = vadd.f32 %v800, %v613
    %v802 = vadd.f32 %v801, %v616
    %v803 = vadd.f32 %v802, %v621
    %v804 = vadd.f32 %v803, %v624
    %v805 = vadd.f32 %v804, %v629
    %v806 = vadd.f32 %v805, %v632
    %v807 = vadd.f32 %v806, %v637
    %v808 = vadd.f32 %v807, %v640
    %v809 = vadd.f32 %v808, %v645
    %v810 = vadd.f32 %v809, %v648
    %v811 = vadd.f32 %v810, %v653
    %v812 = vadd.f32 %v811, %v656
    %v813 = vadd.f32 %v812, %v661
    %v814 = vadd.f32 %v813, %v664
    %v815 = vadd.f32 %v814, %v669
    %v816 = vadd.f32 %v815, %v672
    %v817 = vadd.f32 %v816, %v677
    %v818 = vadd.f32 %v817, %v680
    %v819 = vadd.f32 %v818, %v685
    %v820 = vadd.f32 %v819, %v688
    %v821 = vrot.slane %v820, 4
    %v822 = vadd.f32 %v820, %v821
    %v823 = vrot.slane %v822, 2
    %v824 = vadd.f32 %v822, %v823
    %v825 = vrot.slane %v824, 1
    %v826 = vadd.f32 %v824, %v825
    %v827 = vadd.f32 %v757, %v826
    %828 = vst [vmem:[#allocation3] sm:$0x1] %v827
    %v829 = vld [vmem:[#allocation4] sm:$0x1]
    %v830 = vmul.f32 %v437, %v437
    %v831 = vmul.f32 %v440, %v440
    %v832 = vmul.f32 %v445, %v445
    %v833 = vmul.f32 %v448, %v448
    %v834 = vmul.f32 %v453, %v453
    %v835 = vmul.f32 %v456, %v456
    %v836 = vmul.f32 %v461, %v461
    %v837 = vmul.f32 %v464, %v464
    %v838 = vmul.f32 %v469, %v469
    %v839 = vmul.f32 %v472, %v472
    %v840 = vmul.f32 %v477, %v477
    %v841 = vmul.f32 %v480, %v480
    %v842 = vmul.f32 %v485, %v485
    %v843 = vmul.f32 %v488, %v488
    %v844 = vmul.f32 %v493, %v493
    %v845 = vmul.f32 %v496, %v496
    %v846 = vmul.f32 %v501, %v501
    %v847 = vmul.f32 %v504, %v504
    %v848 = vmul.f32 %v509, %v509
    %v849 = vmul.f32 %v512, %v512
    %v850 = vmul.f32 %v517, %v517
    %v851 = vmul.f32 %v520, %v520
    %v852 = vmul.f32 %v525, %v525
    %v853 = vmul.f32 %v528, %v528
    %v854 = vmul.f32 %v533, %v533
    %v855 = vmul.f32 %v536, %v536
    %v856 = vmul.f32 %v541, %v541
    %v857 = vmul.f32 %v544, %v544
    %v858 = vmul.f32 %v549, %v549
    %v859 = vmul.f32 %v552, %v552
    %v860 = vmul.f32 %v557, %v557
    %v861 = vmul.f32 %v560, %v560
    %v862 = vmul.f32 %v565, %v565
    %v863 = vmul.f32 %v568, %v568
    %v864 = vmul.f32 %v573, %v573
    %v865 = vmul.f32 %v576, %v576
    %v866 = vmul.f32 %v581, %v581
    %v867 = vmul.f32 %v584, %v584
    %v868 = vmul.f32 %v589, %v589
    %v869 = vmul.f32 %v592, %v592
    %v870 = vmul.f32 %v597, %v597
    %v871 = vmul.f32 %v600, %v600
    %v872 = vmul.f32 %v605, %v605
    %v873 = vmul.f32 %v608, %v608
    %v874 = vmul.f32 %v613, %v613
    %v875 = vmul.f32 %v616, %v616
    %v876 = vmul.f32 %v621, %v621
    %v877 = vmul.f32 %v624, %v624
    %v878 = vmul.f32 %v629, %v629
    %v879 = vmul.f32 %v632, %v632
    %v880 = vmul.f32 %v637, %v637
    %v881 = vmul.f32 %v640, %v640
    %v882 = vmul.f32 %v645, %v645
    %v883 = vmul.f32 %v648, %v648
    %v884 = vmul.f32 %v653, %v653
    %v885 = vmul.f32 %v656, %v656
    %v886 = vmul.f32 %v661, %v661
    %v887 = vmul.f32 %v664, %v664
    %v888 = vmul.f32 %v669, %v669
    %v889 = vmul.f32 %v672, %v672
    %v890 = vmul.f32 %v677, %v677
    %v891 = vmul.f32 %v680, %v680
    %v892 = vmul.f32 %v685, %v685
    %v893 = vmul.f32 %v688, %v688
    %v894 = vadd.f32 %v830, %v831
    %v895 = vadd.f32 %v894, %v832
    %v896 = vadd.f32 %v895, %v833
    %v897 = vadd.f32 %v896, %v834
    %v898 = vadd.f32 %v897, %v835
    %v899 = vadd.f32 %v898, %v836
    %v900 = vadd.f32 %v899, %v837
    %v901 = vadd.f32 %v900, %v838
    %v902 = vadd.f32 %v901, %v839
    %v903 = vadd.f32 %v902, %v840
    %v904 = vadd.f32 %v903, %v841
    %v905 = vadd.f32 %v904, %v842
    %v906 = vadd.f32 %v905, %v843
    %v907 = vadd.f32 %v906, %v844
    %v908 = vadd.f32 %v907, %v845
    %v909 = vadd.f32 %v908, %v846
    %v910 = vadd.f32 %v909, %v847
    %v911 = vadd.f32 %v910, %v848
    %v912 = vadd.f32 %v911, %v849
    %v913 = vadd.f32 %v912, %v850
    %v914 = vadd.f32 %v913, %v851
    %v915 = vadd.f32 %v914, %v852
    %v916 = vadd.f32 %v915, %v853
    %v917 = vadd.f32 %v916, %v854
    %v918 = vadd.f32 %v917, %v855
    %v919 = vadd.f32 %v918, %v856
    %v920 = vadd.f32 %v919, %v857
    %v921 = vadd.f32 %v920, %v858
    %v922 = vadd.f32 %v921, %v859
    %v923 = vadd.f32 %v922, %v860
    %v924 = vadd.f32 %v923, %v861
    %v925 = vadd.f32 %v924, %v862
    %v926 = vadd.f32 %v925, %v863
    %v927 = vadd.f32 %v926, %v864
    %v928 = vadd.f32 %v927, %v865
    %v929 = vadd.f32 %v928, %v866
    %v930 = vadd.f32 %v929, %v867
    %v931 = vadd.f32 %v930, %v868
    %v932 = vadd.f32 %v931, %v869
    %v933 = vadd.f32 %v932, %v870
    %v934 = vadd.f32 %v933, %v871
    %v935 = vadd.f32 %v934, %v872
    %v936 = vadd.f32 %v935, %v873
    %v937 = vadd.f32 %v936, %v874
    %v938 = vadd.f32 %v937, %v875
    %v939 = vadd.f32 %v938, %v876
    %v940 = vadd.f32 %v939, %v877
    %v941 = vadd.f32 %v940, %v878
    %v942 = vadd.f32 %v941, %v879
    %v943 = vadd.f32 %v942, %v880
    %v944 = vadd.f32 %v943, %v881
    %v945 = vadd.f32 %v944, %v882
    %v946 = vadd.f32 %v945, %v883
    %v947 = vadd.f32 %v946, %v884
    %v948 = vadd.f32 %v947, %v885
    %v949 = vadd.f32 %v948, %v886
    %v950 = vadd.f32 %v949, %v887
    %v951 = vadd.f32 %v950, %v888
    %v952 = vadd.f32 %v951, %v889
    %v953 = vadd.f32 %v952, %v890
    %v954 = vadd.f32 %v953, %v891
    %v955 = vadd.f32 %v954, %v892
    %v956 = vadd.f32 %v955, %v893
    %v957 = vrot.slane %v956, 4
    %v958 = vadd.f32 %v956, %v957
    %v959 = vrot.slane %v958, 2
    %v960 = vadd.f32 %v958, %v959
    %v961 = vrot.slane %v960, 1
    %v962 = vadd.f32 %v960, %v961
    %v963 = vadd.f32 %v829, %v962
    %964 = vst [vmem:[#allocation4] sm:$0x1] %v963
    // Predicated region
    $region22: #{tpu_custom_call.1} parent=1 // pred_check
      %p965 = pneg %p19
    $region23: #{tpu_custom_call.1} parent=1 // pred_check_branch
      %967 = sbr.rel (%p965) target = $region25
    $region24: #{tpu_custom_call.1} parent=1 // pred_region
      %v968 = vld [vmem:[#allocation3] sm:$0x1]
      %v969 = vmul.f32 %v968, 0.001953125
      %v970 = vld [vmem:[#allocation4] sm:$0x1]
      %v971 = vmul.f32 %v970, 0.001953125
      %v972 = vmul.f32 %v969, %v969
      %v973 = vsub.f32 %v971, %v972
      %v974 = vmax.f32 %v973, 0.0
      %v975 = vld [vmem:[%s2] sm:$0x1]
      %v976 = vadd.f32 %v974, 1e-05
      %v977 = vrsqrt.pop %v976
      %v978 = vmul.f32 %v975, %v977
      %v979 = vld [vmem:[%s3] sm:$0x1]
      %v980 = vmul.f32 %v969, %v978
      %v981 = vsub.f32 %v979, %v980
      %v982 = vld [vmem:[#allocation2] sm:$0xff]
      %v983 = vld [vmem:[#allocation2 + $0x8] sm:$0xff]
      %v984 = vld [vmem:[#allocation2 + $0x10] sm:$0xff]
      %v985 = vld [vmem:[#allocation2 + $0x18] sm:$0xff]
      %v986 = vld [vmem:[#allocation2 + $0x20] sm:$0xff]
      %v987 = vld [vmem:[#allocation2 + $0x28] sm:$0xff]
      %v988 = vld [vmem:[#allocation2 + $0x30] sm:$0xff]
      %v989 = vld [vmem:[#allocation2 + $0x38] sm:$0xff]
      %v990 = vld [vmem:[#allocation2 + $0x40] sm:$0xff]
      %v991 = vld [vmem:[#allocation2 + $0x48] sm:$0xff]
      %v992 = vld [vmem:[#allocation2 + $0x50] sm:$0xff]
      %v993 = vld [vmem:[#allocation2 + $0x58] sm:$0xff]
      %v994 = vld [vmem:[#allocation2 + $0x60] sm:$0xff]
      %v995 = vld [vmem:[#allocation2 + $0x68] sm:$0xff]
      %v996 = vld [vmem:[#allocation2 + $0x70] sm:$0xff]
      %v997 = vld [vmem:[#allocation2 + $0x78] sm:$0xff]
      %v999 = vlaneseq
      %v1000 = vshrl.u32 %v999, 7
      %v1001 = vsub.s32 0, %v1000
      %v1002 = vrot.slane %v978, %v1001
      %v1004 = vmul.f32 %v982, %v1002
      %v1005 = vmul.f32 %v983, %v1002
      %v1006 = vmul.f32 %v984, %v1002
      %v1007 = vmul.f32 %v985, %v1002
      %v1008 = vmul.f32 %v986, %v1002
      %v1009 = vmul.f32 %v987, %v1002
      %v1010 = vmul.f32 %v988, %v1002
      %v1011 = vmul.f32 %v989, %v1002
      %v1012 = vmul.f32 %v990, %v1002
      %v1013 = vmul.f32 %v991, %v1002
      %v1014 = vmul.f32 %v992, %v1002
      %v1015 = vmul.f32 %v993, %v1002
      %v1016 = vmul.f32 %v994, %v1002
      %v1017 = vmul.f32 %v995, %v1002
      %v1018 = vmul.f32 %v996, %v1002
      %v1019 = vmul.f32 %v997, %v1002
      %v1021 = vlaneseq
      %v1022 = vshrl.u32 %v1021, 7
      %v1023 = vsub.s32 0, %v1022
      %v1024 = vrot.slane %v981, %v1023
      %v1026 = vadd.f32 %v1004, %v1024
      %v1027 = vadd.f32 %v1005, %v1024
      %v1028 = vadd.f32 %v1006, %v1024
      %v1029 = vadd.f32 %v1007, %v1024
      %v1030 = vadd.f32 %v1008, %v1024
      %v1031 = vadd.f32 %v1009, %v1024
      %v1032 = vadd.f32 %v1010, %v1024
      %v1033 = vadd.f32 %v1011, %v1024
      %v1034 = vadd.f32 %v1012, %v1024
      %v1035 = vadd.f32 %v1013, %v1024
      %v1036 = vadd.f32 %v1014, %v1024
      %v1037 = vadd.f32 %v1015, %v1024
      %v1038 = vadd.f32 %v1016, %v1024
      %v1039 = vadd.f32 %v1017, %v1024
      %v1040 = vadd.f32 %v1018, %v1024
      %v1041 = vadd.f32 %v1019, %v1024
      %v1042 = vld [vmem:[#allocation2 + $0x80] sm:$0xff]
      %v1043 = vld [vmem:[#allocation2 + $0x88] sm:$0xff]
      %v1044 = vld [vmem:[#allocation2 + $0x90] sm:$0xff]
      %v1045 = vld [vmem:[#allocation2 + $0x98] sm:$0xff]
      %v1046 = vld [vmem:[#allocation2 + $0xa0] sm:$0xff]
      %v1047 = vld [vmem:[#allocation2 + $0xa8] sm:$0xff]
      %v1048 = vld [vmem:[#allocation2 + $0xb0] sm:$0xff]
      %v1049 = vld [vmem:[#allocation2 + $0xb8] sm:$0xff]
      %v1050 = vld [vmem:[#allocation2 + $0xc0] sm:$0xff]
      %v1051 = vld [vmem:[#allocation2 + $0xc8] sm:$0xff]
      %v1052 = vld [vmem:[#allocation2 + $0xd0] sm:$0xff]
      %v1053 = vld [vmem:[#allocation2 + $0xd8] sm:$0xff]
      %v1054 = vld [vmem:[#allocation2 + $0xe0] sm:$0xff]
      %v1055 = vld [vmem:[#allocation2 + $0xe8] sm:$0xff]
      %v1056 = vld [vmem:[#allocation2 + $0xf0] sm:$0xff]
      %v1057 = vld [vmem:[#allocation2 + $0xf8] sm:$0xff]
      %v1058 = vmul.f32 %v1042, %v1002
      %v1059 = vmul.f32 %v1043, %v1002
      %v1060 = vmul.f32 %v1044, %v1002
      %v1061 = vmul.f32 %v1045, %v1002
      %v1062 = vmul.f32 %v1046, %v1002
      %v1063 = vmul.f32 %v1047, %v1002
      %v1064 = vmul.f32 %v1048, %v1002
      %v1065 = vmul.f32 %v1049, %v1002
      %v1066 = vmul.f32 %v1050, %v1002
      %v1067 = vmul.f32 %v1051, %v1002
      %v1068 = vmul.f32 %v1052, %v1002
      %v1069 = vmul.f32 %v1053, %v1002
      %v1070 = vmul.f32 %v1054, %v1002
      %v1071 = vmul.f32 %v1055, %v1002
      %v1072 = vmul.f32 %v1056, %v1002
      %v1073 = vmul.f32 %v1057, %v1002
      %v1074 = vadd.f32 %v1058, %v1024
      %v1075 = vadd.f32 %v1059, %v1024
      %v1076 = vadd.f32 %v1060, %v1024
      %v1077 = vadd.f32 %v1061, %v1024
      %v1078 = vadd.f32 %v1062, %v1024
      %v1079 = vadd.f32 %v1063, %v1024
      %v1080 = vadd.f32 %v1064, %v1024
      %v1081 = vadd.f32 %v1065, %v1024
      %v1082 = vadd.f32 %v1066, %v1024
      %v1083 = vadd.f32 %v1067, %v1024
      %v1084 = vadd.f32 %v1068, %v1024
      %v1085 = vadd.f32 %v1069, %v1024
      %v1086 = vadd.f32 %v1070, %v1024
      %v1087 = vadd.f32 %v1071, %v1024
      %v1088 = vadd.f32 %v1072, %v1024
      %v1089 = vadd.f32 %v1073, %v1024
      %v1090 = vmax.f32 %v1026, %v1074
      %v1091 = vmax.f32 %v1027, %v1075
      %v1092 = vmax.f32 %v1028, %v1076
      %v1093 = vmax.f32 %v1029, %v1077
      %v1094 = vmax.f32 %v1030, %v1078
      %v1095 = vmax.f32 %v1031, %v1079
      %v1096 = vmax.f32 %v1032, %v1080
      %v1097 = vmax.f32 %v1033, %v1081
      %v1098 = vmax.f32 %v1034, %v1082
      %v1099 = vmax.f32 %v1035, %v1083
      %v1100 = vmax.f32 %v1036, %v1084
      %v1101 = vmax.f32 %v1037, %v1085
      %v1102 = vmax.f32 %v1038, %v1086
      %v1103 = vmax.f32 %v1039, %v1087
      %v1104 = vmax.f32 %v1040, %v1088
      %v1105 = vmax.f32 %v1041, %v1089
      %v1106 = vld [vmem:[#allocation2 + $0x100] sm:$0xff]
      %v1107 = vld [vmem:[#allocation2 + $0x108] sm:$0xff]
      %v1108 = vld [vmem:[#allocation2 + $0x110] sm:$0xff]
      %v1109 = vld [vmem:[#allocation2 + $0x118] sm:$0xff]
      %v1110 = vld [vmem:[#allocation2 + $0x120] sm:$0xff]
      %v1111 = vld [vmem:[#allocation2 + $0x128] sm:$0xff]
      %v1112 = vld [vmem:[#allocation2 + $0x130] sm:$0xff]
      %v1113 = vld [vmem:[#allocation2 + $0x138] sm:$0xff]
      %v1114 = vld [vmem:[#allocation2 + $0x140] sm:$0xff]
      %v1115 = vld [vmem:[#allocation2 + $0x148] sm:$0xff]
      %v1116 = vld [vmem:[#allocation2 + $0x150] sm:$0xff]
      %v1117 = vld [vmem:[#allocation2 + $0x158] sm:$0xff]
      %v1118 = vld [vmem:[#allocation2 + $0x160] sm:$0xff]
      %v1119 = vld [vmem:[#allocation2 + $0x168] sm:$0xff]
      %v1120 = vld [vmem:[#allocation2 + $0x170] sm:$0xff]
      %v1121 = vld [vmem:[#allocation2 + $0x178] sm:$0xff]
      %v1122 = vmul.f32 %v1106, %v1002
      %v1123 = vmul.f32 %v1107, %v1002
      %v1124 = vmul.f32 %v1108, %v1002
      %v1125 = vmul.f32 %v1109, %v1002
      %v1126 = vmul.f32 %v1110, %v1002
      %v1127 = vmul.f32 %v1111, %v1002
      %v1128 = vmul.f32 %v1112, %v1002
      %v1129 = vmul.f32 %v1113, %v1002
      %v1130 = vmul.f32 %v1114, %v1002
      %v1131 = vmul.f32 %v1115, %v1002
      %v1132 = vmul.f32 %v1116, %v1002
      %v1133 = vmul.f32 %v1117, %v1002
      %v1134 = vmul.f32 %v1118, %v1002
      %v1135 = vmul.f32 %v1119, %v1002
      %v1136 = vmul.f32 %v1120, %v1002
      %v1137 = vmul.f32 %v1121, %v1002
      %v1138 = vadd.f32 %v1122, %v1024
      %v1139 = vadd.f32 %v1123, %v1024
      %v1140 = vadd.f32 %v1124, %v1024
      %v1141 = vadd.f32 %v1125, %v1024
      %v1142 = vadd.f32 %v1126, %v1024
      %v1143 = vadd.f32 %v1127, %v1024
      %v1144 = vadd.f32 %v1128, %v1024
      %v1145 = vadd.f32 %v1129, %v1024
      %v1146 = vadd.f32 %v1130, %v1024
      %v1147 = vadd.f32 %v1131, %v1024
      %v1148 = vadd.f32 %v1132, %v1024
      %v1149 = vadd.f32 %v1133, %v1024
      %v1150 = vadd.f32 %v1134, %v1024
      %v1151 = vadd.f32 %v1135, %v1024
      %v1152 = vadd.f32 %v1136, %v1024
      %v1153 = vadd.f32 %v1137, %v1024
      %v1154 = vld [vmem:[#allocation2 + $0x180] sm:$0xff]
      %v1155 = vld [vmem:[#allocation2 + $0x188] sm:$0xff]
      %v1156 = vld [vmem:[#allocation2 + $0x190] sm:$0xff]
      %v1157 = vld [vmem:[#allocation2 + $0x198] sm:$0xff]
      %v1158 = vld [vmem:[#allocation2 + $0x1a0] sm:$0xff]
      %v1159 = vld [vmem:[#allocation2 + $0x1a8] sm:$0xff]
      %v1160 = vld [vmem:[#allocation2 + $0x1b0] sm:$0xff]
      %v1161 = vld [vmem:[#allocation2 + $0x1b8] sm:$0xff]
      %v1162 = vld [vmem:[#allocation2 + $0x1c0] sm:$0xff]
      %v1163 = vld [vmem:[#allocation2 + $0x1c8] sm:$0xff]
      %v1164 = vld [vmem:[#allocation2 + $0x1d0] sm:$0xff]
      %v1165 = vld [vmem:[#allocation2 + $0x1d8] sm:$0xff]
      %v1166 = vld [vmem:[#allocation2 + $0x1e0] sm:$0xff]
      %v1167 = vld [vmem:[#allocation2 + $0x1e8] sm:$0xff]
      %v1168 = vld [vmem:[#allocation2 + $0x1f0] sm:$0xff]
      %v1169 = vld [vmem:[#allocation2 + $0x1f8] sm:$0xff]
      %v1170 = vmul.f32 %v1154, %v1002
      %v1171 = vmul.f32 %v1155, %v1002
      %v1172 = vmul.f32 %v1156, %v1002
      %v1173 = vmul.f32 %v1157, %v1002
      %v1174 = vmul.f32 %v1158, %v1002
      %v1175 = vmul.f32 %v1159, %v1002
      %v1176 = vmul.f32 %v1160, %v1002
      %v1177 = vmul.f32 %v1161, %v1002
      %v1178 = vmul.f32 %v1162, %v1002
      %v1179 = vmul.f32 %v1163, %v1002
      %v1180 = vmul.f32 %v1164, %v1002
      %v1181 = vmul.f32 %v1165, %v1002
      %v1182 = vmul.f32 %v1166, %v1002
      %v1183 = vmul.f32 %v1167, %v1002
      %v1184 = vmul.f32 %v1168, %v1002
      %v1185 = vmul.f32 %v1169, %v1002
      %v1186 = vadd.f32 %v1170, %v1024
      %v1187 = vadd.f32 %v1171, %v1024
      %v1188 = vadd.f32 %v1172, %v1024
      %v1189 = vadd.f32 %v1173, %v1024
      %v1190 = vadd.f32 %v1174, %v1024
      %v1191 = vadd.f32 %v1175, %v1024
      %v1192 = vadd.f32 %v1176, %v1024
      %v1193 = vadd.f32 %v1177, %v1024
      %v1194 = vadd.f32 %v1178, %v1024
      %v1195 = vadd.f32 %v1179, %v1024
      %v1196 = vadd.f32 %v1180, %v1024
      %v1197 = vadd.f32 %v1181, %v1024
      %v1198 = vadd.f32 %v1182, %v1024
      %v1199 = vadd.f32 %v1183, %v1024
      %v1200 = vadd.f32 %v1184, %v1024
      %v1201 = vadd.f32 %v1185, %v1024
      %v1202 = vmax.f32 %v1138, %v1186
      %v1203 = vmax.f32 %v1139, %v1187
      %v1204 = vmax.f32 %v1140, %v1188
      %v1205 = vmax.f32 %v1141, %v1189
      %v1206 = vmax.f32 %v1142, %v1190
      %v1207 = vmax.f32 %v1143, %v1191
      %v1208 = vmax.f32 %v1144, %v1192
      %v1209 = vmax.f32 %v1145, %v1193
      %v1210 = vmax.f32 %v1146, %v1194
      %v1211 = vmax.f32 %v1147, %v1195
      %v1212 = vmax.f32 %v1148, %v1196
      %v1213 = vmax.f32 %v1149, %v1197
      %v1214 = vmax.f32 %v1150, %v1198
      %v1215 = vmax.f32 %v1151, %v1199
      %v1216 = vmax.f32 %v1152, %v1200
      %v1217 = vmax.f32 %v1153, %v1201
      %v1218 = vmax.f32 %v1090, %v1202
      %v1219 = vmax.f32 %v1091, %v1203
      %v1220 = vmax.f32 %v1092, %v1204
      %v1221 = vmax.f32 %v1093, %v1205
      %v1222 = vmax.f32 %v1094, %v1206
      %v1223 = vmax.f32 %v1095, %v1207
      %v1224 = vmax.f32 %v1096, %v1208
      %v1225 = vmax.f32 %v1097, %v1209
      %v1226 = vmax.f32 %v1098, %v1210
      %v1227 = vmax.f32 %v1099, %v1211
      %v1228 = vmax.f32 %v1100, %v1212
      %v1229 = vmax.f32 %v1101, %v1213
      %v1230 = vmax.f32 %v1102, %v1214
      %v1231 = vmax.f32 %v1103, %v1215
      %v1232 = vmax.f32 %v1104, %v1216
      %v1233 = vmax.f32 %v1105, %v1217
      %v1234 = vmax.f32 %v1218, 0.0
      %v1235 = vmax.f32 %v1219, 0.0
      %v1236 = vmax.f32 %v1220, 0.0
      %v1237 = vmax.f32 %v1221, 0.0
      %v1238 = vmax.f32 %v1222, 0.0
      %v1239 = vmax.f32 %v1223, 0.0
      %v1240 = vmax.f32 %v1224, 0.0
      %v1241 = vmax.f32 %v1225, 0.0
      %v1242 = vmax.f32 %v1226, 0.0
      %v1243 = vmax.f32 %v1227, 0.0
      %v1244 = vmax.f32 %v1228, 0.0
      %v1245 = vmax.f32 %v1229, 0.0
      %v1246 = vmax.f32 %v1230, 0.0
      %v1247 = vmax.f32 %v1231, 0.0
      %v1248 = vmax.f32 %v1232, 0.0
      %v1249 = vmax.f32 %v1233, 0.0
      %1250 = vst [vmem:[#allocation5] sm:$0xff] %v1234
      %1251 = vst [vmem:[#allocation5 + $0x8] sm:$0xff] %v1235
      %1252 = vst [vmem:[#allocation5 + $0x10] sm:$0xff] %v1236
      %1253 = vst [vmem:[#allocation5 + $0x18] sm:$0xff] %v1237
      %1254 = vst [vmem:[#allocation5 + $0x20] sm:$0xff] %v1238
      %1255 = vst [vmem:[#allocation5 + $0x28] sm:$0xff] %v1239
      %1256 = vst [vmem:[#allocation5 + $0x30] sm:$0xff] %v1240
      %1257 = vst [vmem:[#allocation5 + $0x38] sm:$0xff] %v1241
      %1258 = vst [vmem:[#allocation5 + $0x40] sm:$0xff] %v1242
      %1259 = vst [vmem:[#allocation5 + $0x48] sm:$0xff] %v1243
      %1260 = vst [vmem:[#allocation5 + $0x50] sm:$0xff] %v1244
      %1261 = vst [vmem:[#allocation5 + $0x58] sm:$0xff] %v1245
      %1262 = vst [vmem:[#allocation5 + $0x60] sm:$0xff] %v1246
      %1263 = vst [vmem:[#allocation5 + $0x68] sm:$0xff] %v1247
      %1264 = vst [vmem:[#allocation5 + $0x70] sm:$0xff] %v1248
      %1265 = vst [vmem:[#allocation5 + $0x78] sm:$0xff] %v1249
    $region25: #{tpu_custom_call.1} parent=1 // pred_fallthru
      _
    // Predicated region
    $region26: #{tpu_custom_call.1} parent=1 // pred_check
      _
    $region27: #{tpu_custom_call.1} parent=1 // pred_check_branch
      %1267 = sbr.rel (0) target = $region29
    $region28: #{tpu_custom_call.1} parent=1 // pred_region
      %s1269 = ssub.s32 2048, 2048
      %1270 = vsyncadd [#allocation6], %s1269
      %s1271 = sshll.u32 [#allocation5], 4
      %s1272 = int_to_ptr.vmem [resolvable:$true] %s1271
      %1277 = dma.vmem_to_hbm [thread:$0]  %s1272, 2048, %s4, [#allocation6], 128, 128, 8
    $region29: #{tpu_custom_call.1} parent=1 // pred_fallthru
      _
    // Predicated region
    $region30: #{tpu_custom_call.1} parent=1 // pred_check
      _
    $region31: #{tpu_custom_call.1} parent=1 // pred_check_branch
      %1279 = sbr.rel (0) target = $region33
    $region32: #{tpu_custom_call.1} parent=1 // pred_region
      %1280 = dma.done [#allocation6], 2048
    $region33: #{tpu_custom_call.1} parent=1 // pred_fallthru
      _
    %1281 = vsyncpa [#allocation6], 1

</llo_original>
